<compile_context>
chip_gen: v7x
topology: tpu7x:2x2x1
jax: 0.10.0
libtpu: 0.0.40
codegen_flags: <defaults>
</compile_context>

<pallas_src>
import functools

import jax
import jax.numpy as jnp
from jax import lax
from jax.experimental import pallas as pl
from jax.experimental.pallas import tpu as pltpu

LANE = 128
SUBLANE = 8
MAX_ROW_TILE = 8192  # 8192 x 128 f32 = 4 MiB per input block


def _dice_sums_kernel(p_ref, t_ref, out_ref, acc_pt, acc_s, *,
                      num_blocks, inner_steps, tail_rows, has_duplicate):
    """Accumulate sum(sigmoid(p)*t) and sum(sigmoid(p)+t) per split.

    Output block is (16, LANE): rows 0:8 hold the per-split partial of
    sum(sigmoid(p)*t), rows 8:16 hold sum(sigmoid(p)+t).
    """
    s = pl.program_id(0)
    i = pl.program_id(1)
    row_tile = p_ref.shape[0]
    glob = s * inner_steps + i  # global block index for this step

    @pl.when(i == 0)
    def _():
        acc_pt[...] = jnp.zeros_like(acc_pt)
        acc_s[...] = jnp.zeros_like(acc_s)

    def accumulate(p_sig, t32):
        pt = p_sig * t32
        ps = p_sig + t32
        if row_tile % SUBLANE == 0 and row_tile > SUBLANE:
            # (row_tile, 128) -> (row_tile//8, 8, 128) is a native-tile view;
            # sum over axis 0 is pure vreg adds into the (8,128) accumulator.
            acc_pt[...] += jnp.sum(
                pt.reshape(row_tile // SUBLANE, SUBLANE, LANE), axis=0)
            acc_s[...] += jnp.sum(
                ps.reshape(row_tile // SUBLANE, SUBLANE, LANE), axis=0)
        elif row_tile == SUBLANE:
            acc_pt[...] += pt
            acc_s[...] += ps
        else:
            # Tiny full-extent block whose row count is not a multiple of 8.
            acc_pt[0:1, :] += jnp.sum(pt, axis=0, keepdims=True)
            acc_s[0:1, :] += jnp.sum(ps, axis=0, keepdims=True)

    x = p_ref[...].astype(jnp.float32)
    t32 = t_ref[...].astype(jnp.float32)
    # sigmoid(x) == 0.5*tanh(0.5*x)+0.5: keeps the transcendental on the EUP
    # slot and avoids a VALU divide/Newton sequence.
    p_sig = 0.5 * jnp.tanh(0.5 * x) + 0.5

    if tail_rows == row_tile and not has_duplicate:
        # Every grid step is a real, full block: pure fast path, no masking.
        accumulate(p_sig, t32)
    elif tail_rows == row_tile:
        # All real blocks are full, but the last split has a duplicated
        # (clamped) step that must be skipped.
        @pl.when(glob < num_blocks)
        def _():
            accumulate(p_sig, t32)
    else:
        # Interior blocks: fast path, no mask.
        @pl.when(glob < num_blocks - 1)
        def _():
            accumulate(p_sig, t32)

        # Single partial last block: select-based masking so garbage
        # (possibly NaN) rows beyond the valid range never reach the sums.
        @pl.when(glob == num_blocks - 1)
        def _():
            ridx = lax.broadcasted_iota(jnp.int32, (row_tile, LANE), 0)
            valid = ridx < tail_rows
            accumulate(jnp.where(valid, p_sig, 0.0),
                       jnp.where(valid, t32, 0.0))

    @pl.when(i == inner_steps - 1)
    def _():
        out_ref[0:SUBLANE, :] = acc_pt[...]
        out_ref[SUBLANE:2 * SUBLANE, :] = acc_s[...]


def dice_loss(prediction, target, smooth=1e-08):
    """Pallas TPU implementation of DiceLoss.forward."""
    assert prediction.shape == target.shape
    n = prediction.size

    p_flat = prediction.reshape(-1)
    t_flat = target.reshape(-1)

    # Pad only up to a LANE multiple (<=127 zeros, only when needed).
    # sigmoid(0)=0.5 and t_pad=0, so the pad adds exactly 0.5*col_pad to
    # sum_s and nothing to sum(p*t); corrected analytically below.
    col_pad = (-n) % LANE
    if col_pad:
        p_flat = jnp.pad(p_flat, (0, col_pad))
        t_flat = jnp.pad(t_flat, (0, col_pad))

    rows = (n + col_pad) // LANE
    p2 = p_flat.reshape(rows, LANE)
    t2 = t_flat.reshape(rows, LANE)

    # Generation-aware tile sizing: 2 inputs x 2 buffers x block must fit the
    # VMEM budget (v7x only has 64 MiB per TensorCore).
    bytes_per_row = LANE * (p2.dtype.itemsize + t2.dtype.itemsize)
    try:
        vmem_cap = int(pltpu.get_tpu_info().vmem_capacity_bytes)
    except Exception:  # conservative fallback
        vmem_cap = 64 << 20
    budget = min(vmem_cap // 2, 48 << 20)
    max_rows = max(SUBLANE,
                   (budget // (2 * bytes_per_row)) // SUBLANE * SUBLANE)
    row_tile_cap = min(MAX_ROW_TILE, max_rows)

    if rows <= row_tile_cap:
        row_tile = rows  # single full-extent block
    else:
        row_tile = row_tile_cap

    num_blocks = pl.cdiv(rows, row_tile)
    tail_rows = rows - (num_blocks - 1) * row_tile  # valid rows in last block

    # v7x megacore split: leading "parallel" axis of size 2 with per-split
    # partial outputs; sequential (and harmless) on 1-TC chips.  Uneven block
    # counts are handled by clamping the index map and skipping the duplicate.
    n_split = 2 if num_blocks >= 2 else 1
    inner_steps = pl.cdiv(num_blocks, n_split)
    has_duplicate = n_split * inner_steps > num_blocks

    kernel = functools.partial(
        _dice_sums_kernel,
        num_blocks=num_blocks,
        inner_steps=inner_steps,
        tail_rows=tail_rows,
        has_duplicate=has_duplicate,
    )

    def in_map(s, i):
        return (jnp.minimum(s * inner_steps + i, num_blocks - 1), 0)

    tile_spec = pl.BlockSpec((row_tile, LANE), in_map)

    block_bytes = row_tile * bytes_per_row        # both inputs, one buffer
    vmem_limit = min(vmem_cap, max(32 << 20, 2 * block_bytes + (4 << 20)))

    partial = pl.pallas_call(
        kernel,
        out_shape=jax.ShapeDtypeStruct((n_split * 2 * SUBLANE, LANE),
                                       jnp.float32),
        grid_spec=pltpu.PrefetchScalarGridSpec(
            num_scalar_prefetch=0,
            grid=(n_split, inner_steps),
            in_specs=[tile_spec, tile_spec],
            out_specs=pl.BlockSpec((2 * SUBLANE, LANE), lambda s, i: (s, 0)),
            scratch_shapes=[
                pltpu.VMEM((SUBLANE, LANE), jnp.float32),
                pltpu.VMEM((SUBLANE, LANE), jnp.float32),
            ],
        ),
        compiler_params=pltpu.CompilerParams(
            dimension_semantics=("parallel", "arbitrary"),
            vmem_limit_bytes=int(vmem_limit)),
    )(p2, t2)

    per_split = partial.reshape(n_split, 2, SUBLANE, LANE)
    sum_pt = jnp.sum(per_split[:, 0])            # sum(sigmoid(p) * t)
    sum_s = jnp.sum(per_split[:, 1])             # sum(sigmoid(p)) + sum(t)
    sum_s = sum_s - 0.5 * col_pad                # remove sigmoid(0)=0.5 pad

    intersection = 2.0 * sum_pt + smooth
    union = sum_s + smooth
    return 1.0 - intersection / union


def _reference(prediction, target, smooth=1e-08):
    p = jax.nn.sigmoid(prediction.astype(jnp.float32))
    t = target.astype(jnp.float32)
    intersection = 2.0 * jnp.sum(p * t) + smooth
    union = jnp.sum(p) + jnp.sum(t) + smooth
    return 1.0 - intersection / union


if __name__ == "__main__":
    key = jax.random.PRNGKey(0)
    k1, k2 = jax.random.split(key)

    # Typical DiceLoss use-case: logits + binary target, NCHW.
    prediction = jax.random.normal(k1, (2, 4, 16, 16), dtype=jnp.float32)
    target = (jax.random.uniform(k2, (2, 4, 16, 16)) > 0.5).astype(jnp.float32)

    loss = dice_loss(prediction, target)
    loss = jax.block_until_ready(loss)

    ref = _reference(prediction, target)
    assert jnp.allclose(loss, ref, atol=1e-5, rtol=1e-5), (loss, ref)

    print("KERNEL_OK")
</pallas_src>

<mosaic_0001>
module attributes {stable_mosaic.version = 11 : i64} {
  func.func @_dice_sums_kernel(%arg0: i32, %arg1: i32, %arg2: memref<16x128xf32, #tpu.memory_space<vmem>>, %arg3: memref<16x128xf32, #tpu.memory_space<vmem>>, %arg4: memref<16x128xf32, #tpu.memory_space<vmem>>, %arg5: memref<8x128xf32, #tpu.memory_space<vmem>>, %arg6: memref<8x128xf32, #tpu.memory_space<vmem>>) attributes {dimension_semantics = [#tpu.dimension_semantics<parallel>, #tpu.dimension_semantics<arbitrary>], iteration_bounds = array<i64: 1, 1>, scalar_prefetch = 0 : i64, scratch_operands = 2 : i64, tpu.core_type = #tpu.core_type<tc>, window_params = [{transform_indices = @transform_0, window_bounds = array<i64: 16, 128>}, {transform_indices = @transform_1, window_bounds = array<i64: 16, 128>}, {transform_indices = @transform_2, window_bounds = array<i64: 16, 128>}]} {
    %c0_i32 = arith.constant 0 : i32
    %0 = arith.cmpi eq, %arg1, %c0_i32 : i32
    %1 = arith.extui %0 : i1 to i32
    %c0_i32_0 = arith.constant 0 : i32
    %2 = arith.cmpi ne, %1, %c0_i32_0 : i32
    scf.if %2 {
      %cst_18 = arith.constant 0.000000e+00 : f32
      %27 = vector.broadcast %cst_18 : f32 to vector<8x128xf32>
      %c0_19 = arith.constant 0 : index
      %c0_20 = arith.constant 0 : index
      %28 = vector.load %arg5[%c0_19, %c0_20] : memref<8x128xf32, #tpu.memory_space<vmem>>, vector<8x128xf32>
      tpu.vector_store %arg5[%c0_19, %c0_20], %27 {strides = array<i32>} : memref<8x128xf32, #tpu.memory_space<vmem>>, vector<8x128xf32>,
      %cst_21 = arith.constant 0.000000e+00 : f32
      %29 = vector.broadcast %cst_21 : f32 to vector<8x128xf32>
      %c0_22 = arith.constant 0 : index
      %c0_23 = arith.constant 0 : index
      %30 = vector.load %arg6[%c0_22, %c0_23] : memref<8x128xf32, #tpu.memory_space<vmem>>, vector<8x128xf32>
      tpu.vector_store %arg6[%c0_22, %c0_23], %29 {strides = array<i32>} : memref<8x128xf32, #tpu.memory_space<vmem>>, vector<8x128xf32>,
    } else {
    }
    %c0 = arith.constant 0 : index
    %c0_1 = arith.constant 0 : index
    %3 = vector.load %arg2[%c0, %c0_1] : memref<16x128xf32, #tpu.memory_space<vmem>>, vector<16x128xf32>
    %c0_2 = arith.constant 0 : index
    %c0_3 = arith.constant 0 : index
    %4 = vector.load %arg3[%c0_2, %c0_3] : memref<16x128xf32, #tpu.memory_space<vmem>>, vector<16x128xf32>
    %cst = arith.constant 5.000000e-01 : f32
    %5 = vector.broadcast %cst : f32 to vector<16x128xf32>
    %6 = arith.mulf %5, %3 : vector<16x128xf32>
    %7 = math.tanh %6 : vector<16x128xf32>
    %cst_4 = arith.constant 5.000000e-01 : f32
    %8 = vector.broadcast %cst_4 : f32 to vector<16x128xf32>
    %9 = arith.mulf %8, %7 : vector<16x128xf32>
    %cst_5 = arith.constant 5.000000e-01 : f32
    %10 = vector.broadcast %cst_5 : f32 to vector<16x128xf32>
    %11 = arith.addf %9, %10 : vector<16x128xf32>
    %12 = arith.mulf %11, %4 : vector<16x128xf32>
    %13 = arith.addf %11, %4 : vector<16x128xf32>
    %c0_6 = arith.constant 0 : index
    %c0_7 = arith.constant 0 : index
    %14 = vector.load %arg5[%c0_6, %c0_7] : memref<8x128xf32, #tpu.memory_space<vmem>>, vector<8x128xf32>
    %15 = vector.shape_cast %12 : vector<16x128xf32> to vector<2x8x128xf32>
    %cst_8 = arith.constant dense<0.000000e+00> : vector<8x128xf32>
    %16 = vector.multi_reduction <add>, %15, %cst_8 [0] : vector<2x8x128xf32> to vector<8x128xf32>
    %17 = arith.addf %14, %16 : vector<8x128xf32>
    %c0_9 = arith.constant 0 : index
    %c0_10 = arith.constant 0 : index
    %18 = vector.load %arg5[%c0_9, %c0_10] : memref<8x128xf32, #tpu.memory_space<vmem>>, vector<8x128xf32>
    tpu.vector_store %arg5[%c0_9, %c0_10], %17 {strides = array<i32>} : memref<8x128xf32, #tpu.memory_space<vmem>>, vector<8x128xf32>,
    %c0_11 = arith.constant 0 : index
    %c0_12 = arith.constant 0 : index
    %19 = vector.load %arg6[%c0_11, %c0_12] : memref<8x128xf32, #tpu.memory_space<vmem>>, vector<8x128xf32>
    %20 = vector.shape_cast %13 : vector<16x128xf32> to vector<2x8x128xf32>
    %cst_13 = arith.constant dense<0.000000e+00> : vector<8x128xf32>
    %21 = vector.multi_reduction <add>, %20, %cst_13 [0] : vector<2x8x128xf32> to vector<8x128xf32>
    %22 = arith.addf %19, %21 : vector<8x128xf32>
    %c0_14 = arith.constant 0 : index
    %c0_15 = arith.constant 0 : index
    %23 = vector.load %arg6[%c0_14, %c0_15] : memref<8x128xf32, #tpu.memory_space<vmem>>, vector<8x128xf32>
    tpu.vector_store %arg6[%c0_14, %c0_15], %22 {strides = array<i32>} : memref<8x128xf32, #tpu.memory_space<vmem>>, vector<8x128xf32>,
    %c0_i32_16 = arith.constant 0 : i32
    %24 = arith.cmpi eq, %arg1, %c0_i32_16 : i32
    %25 = arith.extui %24 : i1 to i32
    %c0_i32_17 = arith.constant 0 : i32
    %26 = arith.cmpi ne, %25, %c0_i32_17 : i32
    scf.if %26 {
      %c0_18 = arith.constant 0 : index
      %c0_19 = arith.constant 0 : index
      %27 = vector.load %arg5[%c0_18, %c0_19] : memref<8x128xf32, #tpu.memory_space<vmem>>, vector<8x128xf32>
      %c0_20 = arith.constant 0 : index
      %c0_21 = arith.constant 0 : index
      %28 = vector.load %arg4[%c0_20, %c0_21] : memref<16x128xf32, #tpu.memory_space<vmem>>, vector<8x128xf32>
      tpu.vector_store %arg4[%c0_20, %c0_21], %27 {strides = array<i32>} : memref<16x128xf32, #tpu.memory_space<vmem>>, vector<8x128xf32>,
      %c0_22 = arith.constant 0 : index
      %c0_23 = arith.constant 0 : index
      %29 = vector.load %arg6[%c0_22, %c0_23] : memref<8x128xf32, #tpu.memory_space<vmem>>, vector<8x128xf32>
      %c8 = arith.constant 8 : index
      %c0_24 = arith.constant 0 : index
      %30 = vector.load %arg4[%c8, %c0_24] : memref<16x128xf32, #tpu.memory_space<vmem>>, vector<8x128xf32>
      tpu.vector_store %arg4[%c8, %c0_24], %29 {strides = array<i32>} : memref<16x128xf32, #tpu.memory_space<vmem>>, vector<8x128xf32>,
    } else {
    }
    return
  }
  func.func @transform_0(%arg0: i32, %arg1: i32) -> (i32, i32) {
    %c1_i32 = arith.constant 1 : i32
    %0 = arith.muli %arg0, %c1_i32 : i32
    %1 = arith.addi %0, %arg1 : i32
    %c0_i32 = arith.constant 0 : i32
    %2 = arith.minsi %1, %c0_i32 : i32
    %c0_i32_0 = arith.constant 0 : i32
    %c0_i32_1 = arith.constant 0 : i32
    return %2, %c0_i32_0 : i32, i32
  }
  func.func @transform_1(%arg0: i32, %arg1: i32) -> (i32, i32) {
    %c1_i32 = arith.constant 1 : i32
    %0 = arith.muli %arg0, %c1_i32 : i32
    %1 = arith.addi %0, %arg1 : i32
    %c0_i32 = arith.constant 0 : i32
    %2 = arith.minsi %1, %c0_i32 : i32
    %c0_i32_0 = arith.constant 0 : i32
    %c0_i32_1 = arith.constant 0 : i32
    return %2, %c0_i32_0 : i32, i32
  }
  func.func @transform_2(%arg0: i32, %arg1: i32) -> (i32, i32) {
    %c0_i32 = arith.constant 0 : i32
    %c0_i32_0 = arith.constant 0 : i32
    return %arg0, %c0_i32 : i32, i32
  }
}

</mosaic_0001>

<llo_original>
// kernel: tpu_custom_call.1
$region0: #{tpu_custom_call.1}
  #allocation0 [shape = 'u32[]', space=smem, size = 0x4, offset = 0x4, fixed_abs, tag = 'smem constant byte address 0x4 - core index']
  #allocation1 [shape = 'u32[144,128]{1,0:T(1,128)}', space=vmem, size = 0x12000, scoped, tag = 'internal scratch']
  #allocation2 [shape = 'f32[8,128]{1,0:T(8,128)}', space=vmem, size = 0x1000, scoped, tag = 'scratch operand']
  #allocation3 [shape = 'f32[8,128]{1,0:T(8,128)}', space=vmem, size = 0x1000, scoped, tag = 'scratch operand']
  %s0 = inlined_call_operand.hbm [shape: f32[16,128], index: 0, kind: input, shape index: {}]
  %s1 = inlined_call_operand.hbm [shape: f32[16,128], index: 1, kind: input, shape index: {}]
  %s2 = inlined_call_operand.hbm [shape: f32[16,128], index: 2, kind: output, shape index: {}]
  %s3 = sld [smem:[#allocation0]]
  $region34: #{tpu_custom_call.1} parent=0
    _
  %s5 = ssub.s32 1, %s3
  %s6 = scalar_select 0, %s5, %s3
  $region1: #{tpu_custom_call.1} parent=0
    #allocation4 [shape = 'u8[8192]{0}', space=vmem, size = 0x2000, scoped, tag = 'input window, operand 0, single buffered']
    #allocation5 [shape = 's32[1]{0}', space=sflag, size = 0x4, scoped, tag = 'scoped memory for tpu_custom_call.1']
    #allocation6 [shape = 's32[1]{0}', space=sflag, size = 0x4, scoped, tag = 'scoped memory for tpu_custom_call.1']
    #allocation7 [shape = 'u8[8192]{0}', space=vmem, size = 0x2000, scoped, tag = 'input window, operand 1, single buffered']
    #allocation8 [shape = 's32[1]{0}', space=sflag, size = 0x4, scoped, tag = 'scoped memory for tpu_custom_call.1']
    #allocation9 [shape = 'u8[8192]{0}', space=vmem, size = 0x2000, scoped, tag = 'output window, operand 0, single buffered']
    %7 = vsyncpa [#allocation5], 0
    %8 = vsyncpa [#allocation8], 0
    %9 = vsyncpa [#allocation6], 0
    // Predicated region
    $region2: #{tpu_custom_call.1} parent=1 // pred_check
      _
    $region3: #{tpu_custom_call.1} parent=1 // pred_check_branch
      %11 = sbr.rel (0) target = $region5
    $region4: #{tpu_custom_call.1} parent=1 // pred_region
      %s12 = sadd.s32 0, 0
      %p13 = scmp.lt.s32.totalorder %s12, 0
      %s14 = scalar_select %p13, %s12, 0
      %s15 = smul.u32 2, %s14
      %s17 = ssub.s32 256, 256
      %18 = vsyncadd [#allocation5], %s17
      %s19 = smul.addr %s15, 128
      %s20 = scalar_lea.hbm %s0, %s19
      %s21 = sshll.u32 [#allocation4], 4
      %s22 = int_to_ptr.vmem [resolvable:$true] %s21
      %27 = dma.hbm_to_vmem [thread:$0]  %s20, 256, %s22, [#allocation5], 128, 128, 8
    $region5: #{tpu_custom_call.1} parent=1 // pred_fallthru
      _
    // Predicated region
    $region6: #{tpu_custom_call.1} parent=1 // pred_check
      _
    $region7: #{tpu_custom_call.1} parent=1 // pred_check_branch
      %29 = sbr.rel (0) target = $region9
    $region8: #{tpu_custom_call.1} parent=1 // pred_region
      %s30 = sadd.s32 0, 0
      %p31 = scmp.lt.s32.totalorder %s30, 0
      %s32 = scalar_select %p31, %s30, 0
      %s33 = smul.u32 2, %s32
      %s35 = ssub.s32 256, 256
      %36 = vsyncadd [#allocation8], %s35
      %s37 = smul.addr %s33, 128
      %s38 = scalar_lea.hbm %s1, %s37
      %s39 = sshll.u32 [#allocation7], 4
      %s40 = int_to_ptr.vmem [resolvable:$true] %s39
      %45 = dma.hbm_to_vmem [thread:$0]  %s38, 256, %s40, [#allocation8], 128, 128, 8
    $region9: #{tpu_custom_call.1} parent=1 // pred_fallthru
      _
    // Predicated region
    $region10: #{tpu_custom_call.1} parent=1 // pred_check
      _
    $region11: #{tpu_custom_call.1} parent=1 // pred_check_branch
      %47 = sbr.rel (0) target = $region13
    $region12: #{tpu_custom_call.1} parent=1 // pred_region
      %48 = dma.done [#allocation5], 256
    $region13: #{tpu_custom_call.1} parent=1 // pred_fallthru
      _
    // Predicated region
    $region14: #{tpu_custom_call.1} parent=1 // pred_check
      _
    $region15: #{tpu_custom_call.1} parent=1 // pred_check_branch
      %50 = sbr.rel (0) target = $region17
    $region16: #{tpu_custom_call.1} parent=1 // pred_region
      %51 = dma.done [#allocation8], 256
    $region17: #{tpu_custom_call.1} parent=1 // pred_fallthru
      _
    %s52 = sadd.s32 0, 0
    %p53 = scmp.lt.s32.totalorder %s52, 0
    %s54 = scalar_select %p53, %s52, 0
    %s55 = smul.u32 2, %s54
    %s56 = sadd.s32 0, 0
    %p57 = scmp.lt.s32.totalorder %s56, 0
    %s58 = scalar_select %p57, %s56, 0
    %s59 = smul.u32 2, %s58
    %p60 = scmp.eq.s32.totalorder 0, 0
    // Predicated region
    $region18: #{tpu_custom_call.1} parent=1 // pred_check
      %p61 = pneg %p60
    $region19: #{tpu_custom_call.1} parent=1 // pred_check_branch
      %63 = sbr.rel (%p61) target = $region21
    $region20: #{tpu_custom_call.1} parent=1 // pred_region
      %64 = vst [vmem:[#allocation2] sm:$0xff] 0.0
      %65 = vst [vmem:[#allocation3] sm:$0xff] 0.0
    $region21: #{tpu_custom_call.1} parent=1 // pred_fallthru
      _
    %v66 = vld [vmem:[#allocation4] sm:$0xff]
    %v67 = vld [vmem:[#allocation4 + $0x8] sm:$0xff]
    %v68 = vld [vmem:[#allocation7] sm:$0xff]
    %v69 = vld [vmem:[#allocation7 + $0x8] sm:$0xff]
    %v70 = vmul.f32 %v66, 0.5
    %v71 = vmul.f32 %v67, 0.5
    %v72 = vtanh.pop %v70
    %v73 = vtanh.pop %v71
    %v74 = vmul.f32 %v72, 0.5
    %v75 = vmul.f32 %v73, 0.5
    %v76 = vadd.f32 %v74, 0.5
    %v77 = vadd.f32 %v75, 0.5
    %v78 = vmul.f32 %v76, %v68
    %v79 = vmul.f32 %v77, %v69
    %v80 = vadd.f32 %v76, %v68
    %v81 = vadd.f32 %v77, %v69
    %v82 = vld [vmem:[#allocation2] sm:$0xff]
    %v83 = vadd.f32 %v78, %v79
    %v84 = vadd.f32 %v82, %v83
    %85 = vst [vmem:[#allocation2] sm:$0xff] %v84
    %v86 = vld [vmem:[#allocation3] sm:$0xff]
    %v87 = vadd.f32 %v80, %v81
    %v88 = vadd.f32 %v86, %v87
    %89 = vst [vmem:[#allocation3] sm:$0xff] %v88
    // Predicated region
    $region22: #{tpu_custom_call.1} parent=1 // pred_check
      %p90 = pneg %p60
    $region23: #{tpu_custom_call.1} parent=1 // pred_check_branch
      %92 = sbr.rel (%p90) target = $region25
    $region24: #{tpu_custom_call.1} parent=1 // pred_region
      %v93 = vld [vmem:[#allocation2] sm:$0xff]
      %94 = vst [vmem:[#allocation9] sm:$0xff] %v93
      %v95 = vld [vmem:[#allocation3] sm:$0xff]
      %96 = vst [vmem:[#allocation9 + $0x8] sm:$0xff] %v95
    $region25: #{tpu_custom_call.1} parent=1 // pred_fallthru
      _
    // Predicated region
    $region26: #{tpu_custom_call.1} parent=1 // pred_check
      _
    $region27: #{tpu_custom_call.1} parent=1 // pred_check_branch
      %98 = sbr.rel (0) target = $region29
    $region28: #{tpu_custom_call.1} parent=1 // pred_region
      %s100 = ssub.s32 256, 256
      %101 = vsyncadd [#allocation6], %s100
      %s102 = sshll.u32 [#allocation9], 4
      %s103 = int_to_ptr.vmem [resolvable:$true] %s102
      %108 = dma.vmem_to_hbm [thread:$0]  %s103, 256, %s2, [#allocation6], 128, 128, 8
    $region29: #{tpu_custom_call.1} parent=1 // pred_fallthru
      _
    // Predicated region
    $region30: #{tpu_custom_call.1} parent=1 // pred_check
      _
    $region31: #{tpu_custom_call.1} parent=1 // pred_check_branch
      %110 = sbr.rel (0) target = $region33
    $region32: #{tpu_custom_call.1} parent=1 // pred_region
      %111 = dma.done [#allocation6], 256
    $region33: #{tpu_custom_call.1} parent=1 // pred_fallthru
      _
    %112 = vsyncpa [#allocation5], 1
    %113 = vsyncpa [#allocation8], 1
    %114 = vsyncpa [#allocation6], 1

</llo_original>
